<compile_context>
chip_gen: v7x
topology: tpu7x:2x2x1
jax: 0.10.0
libtpu: 0.0.40
codegen_flags: <defaults>
</compile_context>

<pallas_src>
import functools

import jax
import jax.numpy as jnp
from jax import lax
from jax.experimental import pallas as pl
from jax.experimental.pallas import tpu as pltpu

EPS = 1e-12  # torch.nn.functional.normalize default eps


def _round_up(v, m):
    return (v + m - 1) // m * m


def _l2_normalize(v, axis):
    # v / max(||v||, eps) == v * rsqrt(max(||v||^2, eps^2)); rsqrt goes to the EUP.
    ss = jnp.sum(v * v, axis=axis, keepdims=True)
    return v * lax.rsqrt(jnp.maximum(ss, EPS * EPS))


def _attn_kernel(x_ref, wqk_ref, bqk_ref, wg_ref, wpf_ref, wf_ref, bt_ref,
                 o_ref, *, scale, dhp, n_real):
    Bt, Np, Din = x_ref.shape
    rows = Bt * Np
    mxu = wqk_ref.dtype

    # Flatten (batch-block, token) into one big MXU row dim (free: Np % 8 == 0).
    x = x_ref[...].reshape(rows, Din)

    # Fused query/key projection: one MXU push with 2*dhp output lanes.
    qk = jnp.dot(x, wqk_ref[...], preferred_element_type=jnp.float32) + bqk_ref[...]
    q = qk[:, :dhp]          # lane-tile aligned split (dhp % 128 == 0)
    k = qk[:, dhp:]

    # L2 normalize along the (zero-padded) feature dim.
    q = _l2_normalize(q, axis=-1)
    k = _l2_normalize(k, axis=-1)

    q_m = q.astype(mxu)                      # reused by qw, G and the tail matmul
    q3m = q_m.reshape(Bt, Np, dhp)
    k3 = k.reshape(Bt, Np, dhp)

    # Per-token logit, lane-dense along tokens: [Bt, 1, Np] via batched matmul.
    wg_b = jnp.broadcast_to(wg_ref[...].reshape(1, 1, dhp), (Bt, 1, dhp))
    qw = jnp.einsum('bqd,bnd->bqn', wg_b, q3m,
                    preferred_element_type=jnp.float32) * scale
    if n_real != Np:
        # Padded tokens must not pollute the token-axis norm or G.
        tok = lax.broadcasted_iota(jnp.int32, (Bt, 1, Np), 2)
        qw = jnp.where(tok < n_real, qw, 0.0)

    # Token-axis normalization (lane reduction) and global query via the MXU.
    A = _l2_normalize(qw, axis=-1)                                   # [Bt, 1, Np]
    G = jnp.einsum('bqn,bnd->bqd', A.astype(mxu), q3m,
                   preferred_element_type=jnp.float32)               # [Bt, 1, dhp]

    gk = (G * k3).reshape(rows, dhp).astype(mxu)

    # Fused tail: final(Proj(gk) + q) = gk @ (wp@wf) + q @ wf + (bp@wf + bf).
    out = (jnp.dot(gk, wpf_ref[...], preferred_element_type=jnp.float32)
           + jnp.dot(q_m, wf_ref[...], preferred_element_type=jnp.float32)
           + bt_ref[...])
    o_ref[...] = out.reshape(Bt, Np, out.shape[-1]).astype(o_ref.dtype)


def _tpu_generation():
    try:
        kind = jax.devices()[0].device_kind.lower()
    except Exception:
        return None
    for g in ("v7", "v6", "v5"):
        if g in kind:
            return g
    return None


def _pick_block_batch(B, Np, *, target_rows, min_steps, prefer_even_steps):
    """Largest divisor Bt of B with Bt*Np <= target_rows, keeping at least
    `min_steps` grid steps (so e.g. v7x's two TensorCores stay pipelined)."""
    divisors = [d for d in range(1, B + 1) if B % d == 0]
    steps_req = min(min_steps, B)
    cands = [d for d in divisors if d * Np <= target_rows and B // d >= steps_req]
    if not cands:
        cands = [d for d in divisors if d * Np <= target_rows] or [1]
    if prefer_even_steps:
        even = [d for d in cands if (B // d) % 2 == 0]
        if even:
            cands = even
    return max(cands)


def efficient_additive_attention(x, params, *, token_dim, block_batch=None,
                                 mxu_dtype=jnp.bfloat16):
    B, N, D_in = x.shape
    Dh = params["wq"].shape[1]
    scale = token_dim ** (-0.5)
    out_dtype = x.dtype
    f32 = jnp.float32

    # Lane / sublane alignment (zero padding is exact for this module).
    Dhp = _round_up(Dh, 128)
    Tdp = _round_up(token_dim, 128)
    Np = _round_up(N, 8)

    def pad_last(w, cols):
        return jnp.pad(w, [(0, 0)] * (w.ndim - 1) + [(0, cols - w.shape[-1])])

    wq = pad_last(params["wq"].astype(f32), Dhp)
    wk = pad_last(params["wk"].astype(f32), Dhp)
    bq = pad_last(params["bq"].astype(f32), Dhp)
    bk = pad_last(params["bk"].astype(f32), Dhp)
    wg = pad_last(params["wg"].astype(f32), Dhp)     # w_g pre-transposed to [1, Dh]
    wp = jnp.pad(params["wp"].astype(f32), ((0, Dhp - Dh), (0, Dhp - Dh)))
    bp = pad_last(params["bp"].astype(f32), Dhp)
    wf = jnp.pad(params["wf"].astype(f32), ((0, Dhp - Dh), (0, Tdp - token_dim)))
    bf = pad_last(params["bf"].astype(f32), Tdp)

    # Pack / pre-fuse weights once (f32 algebra, then cast for the MXU).
    w_qk = jnp.concatenate([wq, wk], axis=1).astype(mxu_dtype)   # [D_in, 2*Dhp]
    b_qk = jnp.concatenate([bq, bk], axis=1)                     # [1, 2*Dhp] f32
    w_pf = (wp @ wf).astype(mxu_dtype)                           # [Dhp, Tdp]
    w_f = wf.astype(mxu_dtype)                                   # [Dhp, Tdp]
    b_tail = bp @ wf + bf                                        # [1, Tdp]  f32
    w_g = wg.astype(mxu_dtype)                                   # [1, Dhp]

    x_in = x.astype(mxu_dtype)
    if Np != N:
        x_in = jnp.pad(x_in, ((0, 0), (0, Np - N), (0, 0)))

    # Generation-aware blocking / VMEM limits.
    gen = _tpu_generation()
    if gen == "v7":        # 2 TCs, 64 MiB physical VMEM
        min_steps, target_rows, vmem_limit, prefer_even = 4, 1024, 48 << 20, True
    elif gen == "v6":      # 1 TC, 128 MiB VMEM: go big, few grid steps
        min_steps, target_rows, vmem_limit, prefer_even = 1, 2048, 80 << 20, False
    elif gen == "v5":      # 16 MiB default scoped VMEM -> raise it explicitly
        min_steps, target_rows, vmem_limit, prefer_even = 1, 1024, 64 << 20, False
    else:
        min_steps, target_rows, vmem_limit, prefer_even = 1, 1024, None, False

    if block_batch is not None:
        Bt = block_batch
    else:
        Bt = _pick_block_batch(B, Np, target_rows=target_rows,
                               min_steps=min_steps,
                               prefer_even_steps=prefer_even)
    assert B % Bt == 0, (B, Bt)

    def full(shape):
        zeros = (0,) * len(shape)
        return pl.BlockSpec(shape, lambda b: zeros)

    kernel = functools.partial(_attn_kernel, scale=scale, dhp=Dhp, n_real=N)

    cp_kwargs = dict(dimension_semantics=("parallel",))
    if vmem_limit is not None:
        cp_kwargs["vmem_limit_bytes"] = vmem_limit

    # NOTE: the weight specs below have constant index_maps; if VMEM headroom
    # ever becomes tight they could be single-buffered (pipeline_mode) or
    # staged once into scratch to avoid the default double buffer.
    out = pl.pallas_call(
        kernel,
        out_shape=jax.ShapeDtypeStruct((B, Np, Tdp), out_dtype),
        grid_spec=pltpu.PrefetchScalarGridSpec(
            num_scalar_prefetch=0,
            grid=(B // Bt,),
            in_specs=[
                pl.BlockSpec((Bt, Np, D_in), lambda b: (b, 0, 0)),   # x block
                full((D_in, 2 * Dhp)),                               # wq|wk fused
                full((1, 2 * Dhp)),                                  # bq|bk fused
                full((1, Dhp)),                                      # w_g (transposed)
                full((Dhp, Tdp)),                                    # wp @ wf
                full((Dhp, Tdp)),                                    # wf
                full((1, Tdp)),                                      # bp @ wf + bf
            ],
            out_specs=pl.BlockSpec((Bt, Np, Tdp), lambda b: (b, 0, 0)),
        ),
        compiler_params=pltpu.CompilerParams(**cp_kwargs),
    )(x_in, w_qk, b_qk, w_g, w_pf, w_f, b_tail)

    return out[:, :N, :token_dim]


def reference(x, params, *, token_dim):
    scale = token_dim ** (-0.5)
    q = x @ params["wq"] + params["bq"]
    k = x @ params["wk"] + params["bk"]
    q = q / jnp.maximum(jnp.linalg.norm(q, axis=-1, keepdims=True), EPS)
    k = k / jnp.maximum(jnp.linalg.norm(k, axis=-1, keepdims=True), EPS)
    qw = jnp.sum(q * params["wg"][None], axis=-1, keepdims=True)    # [B, N, 1]
    A = qw * scale
    A = A / jnp.maximum(jnp.linalg.norm(A, axis=1, keepdims=True), EPS)
    G = jnp.sum(A * q, axis=1, keepdims=True)                       # [B, 1, Dh]
    out = (G * k) @ params["wp"] + params["bp"] + q
    out = out @ params["wf"] + params["bf"]
    return out


if __name__ == "__main__":
    # Small, module-consistent shapes: in_dims=32, token_dim=16, num_heads=2.
    B, N = 2, 8
    in_dims, token_dim, num_heads = 32, 16, 2
    Dh = token_dim * num_heads

    key = jax.random.PRNGKey(0)
    ks = jax.random.split(key, 10)
    params = {
        "wq": jax.random.normal(ks[0], (in_dims, Dh), jnp.float32) * 0.1,
        "bq": jax.random.normal(ks[1], (1, Dh), jnp.float32) * 0.1,
        "wk": jax.random.normal(ks[2], (in_dims, Dh), jnp.float32) * 0.1,
        "bk": jax.random.normal(ks[3], (1, Dh), jnp.float32) * 0.1,
        "wg": jax.random.normal(ks[4], (1, Dh), jnp.float32),   # w_g pre-transposed [1, Dh]
        "wp": jax.random.normal(ks[5], (Dh, Dh), jnp.float32) * 0.1,
        "bp": jax.random.normal(ks[6], (1, Dh), jnp.float32) * 0.1,
        "wf": jax.random.normal(ks[7], (Dh, token_dim), jnp.float32) * 0.1,
        "bf": jax.random.normal(ks[8], (1, token_dim), jnp.float32) * 0.1,
    }
    x = jax.random.normal(ks[9], (B, N, in_dims), jnp.float32)

    ref = reference(x, params, token_dim=token_dim)

    # Default path: bf16 MXU operands, f32 accumulation (looser tolerance).
    out = jax.block_until_ready(
        efficient_additive_attention(x, params, token_dim=token_dim))
    assert out.shape == (B, N, token_dim), out.shape
    assert jnp.allclose(out, ref, atol=3e-2, rtol=3e-2), \
        float(jnp.max(jnp.abs(out - ref)))

    # f32 MXU path validates the algebra (QK fusion, tail fold, padding) tightly.
    out_f32 = jax.block_until_ready(
        efficient_additive_attention(x, params, token_dim=token_dim,
                                     mxu_dtype=jnp.float32))
    assert jnp.allclose(out_f32, ref, atol=2e-3, rtol=2e-3), \
        float(jnp.max(jnp.abs(out_f32 - ref)))

    print("KERNEL_OK")
</pallas_src>

<mosaic_0001>
module attributes {stable_mosaic.version = 11 : i64} {
  func.func @_attn_kernel(%arg0: i32, %arg1: memref<2x8x32xbf16, #tpu.memory_space<vmem>>, %arg2: memref<32x256xbf16, #tpu.memory_space<vmem>>, %arg3: memref<1x256xf32, #tpu.memory_space<vmem>>, %arg4: memref<1x128xbf16, #tpu.memory_space<vmem>>, %arg5: memref<128x128xbf16, #tpu.memory_space<vmem>>, %arg6: memref<128x128xbf16, #tpu.memory_space<vmem>>, %arg7: memref<1x128xf32, #tpu.memory_space<vmem>>, %arg8: memref<2x8x128xf32, #tpu.memory_space<vmem>>) attributes {dimension_semantics = [#tpu.dimension_semantics<parallel>], iteration_bounds = array<i64: 1>, scalar_prefetch = 0 : i64, scratch_operands = 0 : i64, tpu.core_type = #tpu.core_type<tc>, window_params = [{transform_indices = @transform_0, window_bounds = array<i64: 2, 8, 32>}, {pipeline_mode = #tpu.pipeline_mode<synchronous>, transform_indices = @transform_1, window_bounds = array<i64: 32, 256>}, {pipeline_mode = #tpu.pipeline_mode<synchronous>, transform_indices = @transform_2, window_bounds = array<i64: 1, 256>}, {pipeline_mode = #tpu.pipeline_mode<synchronous>, transform_indices = @transform_3, window_bounds = array<i64: 1, 128>}, {pipeline_mode = #tpu.pipeline_mode<synchronous>, transform_indices = @transform_4, window_bounds = array<i64: 128, 128>}, {pipeline_mode = #tpu.pipeline_mode<synchronous>, transform_indices = @transform_5, window_bounds = array<i64: 128, 128>}, {pipeline_mode = #tpu.pipeline_mode<synchronous>, transform_indices = @transform_6, window_bounds = array<i64: 1, 128>}, {transform_indices = @transform_7, window_bounds = array<i64: 2, 8, 128>}]} {
    %c0 = arith.constant 0 : index
    %c0_0 = arith.constant 0 : index
    %c0_1 = arith.constant 0 : index
    %0 = vector.load %arg1[%c0, %c0_0, %c0_1] : memref<2x8x32xbf16, #tpu.memory_space<vmem>>, vector<2x8x32xbf16>
    %1 = vector.shape_cast %0 : vector<2x8x32xbf16> to vector<16x32xbf16>
    %c0_2 = arith.constant 0 : index
    %c0_3 = arith.constant 0 : index
    %2 = vector.load %arg2[%c0_2, %c0_3] : memref<32x256xbf16, #tpu.memory_space<vmem>>, vector<32x256xbf16>
    %cst = arith.constant dense<0.000000e+00> : vector<16x256xf32>
    %3 = tpu.matmul %1, %2, %cst {dimension_numbers = #tpu.dot_dimension_numbers<[1], [0], [0], [1], [0, 0, 1, 1], [], []>} : vector<16x32xbf16>, vector<32x256xbf16>, vector<16x256xf32> -> vector<16x256xf32>
    %c0_4 = arith.constant 0 : index
    %c0_5 = arith.constant 0 : index
    %4 = vector.load %arg3[%c0_4, %c0_5] : memref<1x256xf32, #tpu.memory_space<vmem>>, vector<1x256xf32>
    %5 = vector.broadcast %4 : vector<1x256xf32> to vector<16x256xf32>
    %6 = arith.addf %3, %5 : vector<16x256xf32>
    %7 = vector.extract_strided_slice %6 {offsets = [0, 0], sizes = [16, 128], strides = [1, 1]} : vector<16x256xf32> to vector<16x128xf32>
    %8 = vector.extract_strided_slice %6 {offsets = [0, 128], sizes = [16, 128], strides = [1, 1]} : vector<16x256xf32> to vector<16x128xf32>
    %9 = arith.mulf %7, %7 : vector<16x128xf32>
    %cst_6 = arith.constant dense<0.000000e+00> : vector<16xf32>
    %10 = vector.multi_reduction <add>, %9, %cst_6 [1] : vector<16x128xf32> to vector<16xf32>
    %11 = vector.shape_cast %10 : vector<16xf32> to vector<16x1xf32>
    %cst_7 = arith.constant 1.000000e-24 : f32
    %12 = vector.broadcast %cst_7 : f32 to vector<16x1xf32>
    %13 = arith.maximumf %11, %12 : vector<16x1xf32>
    %14 = math.rsqrt %13 : vector<16x1xf32>
    %15 = vector.broadcast %14 : vector<16x1xf32> to vector<16x128xf32>
    %16 = arith.mulf %7, %15 : vector<16x128xf32>
    %17 = arith.mulf %8, %8 : vector<16x128xf32>
    %cst_8 = arith.constant dense<0.000000e+00> : vector<16xf32>
    %18 = vector.multi_reduction <add>, %17, %cst_8 [1] : vector<16x128xf32> to vector<16xf32>
    %19 = vector.shape_cast %18 : vector<16xf32> to vector<16x1xf32>
    %cst_9 = arith.constant 1.000000e-24 : f32
    %20 = vector.broadcast %cst_9 : f32 to vector<16x1xf32>
    %21 = arith.maximumf %19, %20 : vector<16x1xf32>
    %22 = math.rsqrt %21 : vector<16x1xf32>
    %23 = vector.broadcast %22 : vector<16x1xf32> to vector<16x128xf32>
    %24 = arith.mulf %8, %23 : vector<16x128xf32>
    %25 = arith.truncf %16 : vector<16x128xf32> to vector<16x128xbf16>
    %26 = vector.shape_cast %25 : vector<16x128xbf16> to vector<2x8x128xbf16>
    %27 = vector.shape_cast %24 : vector<16x128xf32> to vector<2x8x128xf32>
    %c0_10 = arith.constant 0 : index
    %c0_11 = arith.constant 0 : index
    %28 = vector.load %arg4[%c0_10, %c0_11] : memref<1x128xbf16, #tpu.memory_space<vmem>>, vector<1x128xbf16>
    %29 = vector.shape_cast %28 : vector<1x128xbf16> to vector<1x1x128xbf16>
    %30 = vector.shape_cast %29 : vector<1x1x128xbf16> to vector<1x1x128xbf16>
    %31 = vector.broadcast %30 : vector<1x1x128xbf16> to vector<2x1x128xbf16>
    "tpu.trace_start"() <{level = 10 : i32, message = "bqd,bnd->bqn"}> : () -> ()
    %cst_12 = arith.constant dense<0.000000e+00> : vector<2x1x8xf32>
    %32 = tpu.matmul %31, %26, %cst_12 {dimension_numbers = #tpu.dot_dimension_numbers<[2], [2], [1], [1], [0, 0, 0, 1, 1, 1], [0], [0]>} : vector<2x1x128xbf16>, vector<2x8x128xbf16>, vector<2x1x8xf32> -> vector<2x1x8xf32>
    "tpu.trace_stop"() : () -> ()
    %cst_13 = arith.constant 2.500000e-01 : f32
    %33 = vector.broadcast %cst_13 : f32 to vector<2x1x8xf32>
    %34 = arith.mulf %32, %33 : vector<2x1x8xf32>
    %35 = arith.mulf %34, %34 : vector<2x1x8xf32>
    %cst_14 = arith.constant dense<0.000000e+00> : vector<2x1xf32>
    %36 = vector.multi_reduction <add>, %35, %cst_14 [2] : vector<2x1x8xf32> to vector<2x1xf32>
    %37 = vector.shape_cast %36 : vector<2x1xf32> to vector<2x1x1xf32>
    %cst_15 = arith.constant 1.000000e-24 : f32
    %38 = vector.broadcast %cst_15 : f32 to vector<2x1x1xf32>
    %39 = arith.maximumf %37, %38 : vector<2x1x1xf32>
    %40 = math.rsqrt %39 : vector<2x1x1xf32>
    %41 = vector.broadcast %40 : vector<2x1x1xf32> to vector<2x1x8xf32>
    %42 = arith.mulf %34, %41 : vector<2x1x8xf32>
    %43 = arith.truncf %42 : vector<2x1x8xf32> to vector<2x1x8xbf16>
    "tpu.trace_start"() <{level = 10 : i32, message = "bqn,bnd->bqd"}> : () -> ()
    %cst_16 = arith.constant dense<0.000000e+00> : vector<2x1x128xf32>
    %44 = tpu.matmul %43, %26, %cst_16 {dimension_numbers = #tpu.dot_dimension_numbers<[2], [1], [1], [2], [0, 0, 0, 1, 1, 2], [0], [0]>} : vector<2x1x8xbf16>, vector<2x8x128xbf16>, vector<2x1x128xf32> -> vector<2x1x128xf32>
    "tpu.trace_stop"() : () -> ()
    %45 = vector.broadcast %44 : vector<2x1x128xf32> to vector<2x8x128xf32>
    %46 = arith.mulf %45, %27 : vector<2x8x128xf32>
    %47 = vector.shape_cast %46 : vector<2x8x128xf32> to vector<16x128xf32>
    %48 = arith.truncf %47 : vector<16x128xf32> to vector<16x128xbf16>
    %c0_17 = arith.constant 0 : index
    %c0_18 = arith.constant 0 : index
    %49 = vector.load %arg5[%c0_17, %c0_18] : memref<128x128xbf16, #tpu.memory_space<vmem>>, vector<128x128xbf16>
    %cst_19 = arith.constant dense<0.000000e+00> : vector<16x128xf32>
    %50 = tpu.matmul %48, %49, %cst_19 {dimension_numbers = #tpu.dot_dimension_numbers<[1], [0], [0], [1], [0, 0, 1, 1], [], []>} : vector<16x128xbf16>, vector<128x128xbf16>, vector<16x128xf32> -> vector<16x128xf32>
    %c0_20 = arith.constant 0 : index
    %c0_21 = arith.constant 0 : index
    %51 = vector.load %arg6[%c0_20, %c0_21] : memref<128x128xbf16, #tpu.memory_space<vmem>>, vector<128x128xbf16>
    %cst_22 = arith.constant dense<0.000000e+00> : vector<16x128xf32>
    %52 = tpu.matmul %25, %51, %cst_22 {dimension_numbers = #tpu.dot_dimension_numbers<[1], [0], [0], [1], [0, 0, 1, 1], [], []>} : vector<16x128xbf16>, vector<128x128xbf16>, vector<16x128xf32> -> vector<16x128xf32>
    %53 = arith.addf %50, %52 : vector<16x128xf32>
    %c0_23 = arith.constant 0 : index
    %c0_24 = arith.constant 0 : index
    %54 = vector.load %arg7[%c0_23, %c0_24] : memref<1x128xf32, #tpu.memory_space<vmem>>, vector<1x128xf32>
    %55 = vector.broadcast %54 : vector<1x128xf32> to vector<16x128xf32>
    %56 = arith.addf %53, %55 : vector<16x128xf32>
    %57 = vector.shape_cast %56 : vector<16x128xf32> to vector<2x8x128xf32>
    %c0_25 = arith.constant 0 : index
    %c0_26 = arith.constant 0 : index
    %c0_27 = arith.constant 0 : index
    %58 = vector.load %arg8[%c0_25, %c0_26, %c0_27] : memref<2x8x128xf32, #tpu.memory_space<vmem>>, vector<2x8x128xf32>
    tpu.vector_store %arg8[%c0_25, %c0_26, %c0_27], %57 {strides = array<i32>} : memref<2x8x128xf32, #tpu.memory_space<vmem>>, vector<2x8x128xf32>,
    return
  }
  func.func @transform_0(%arg0: i32) -> (i32, i32, i32) {
    %c0_i32 = arith.constant 0 : i32
    %c0_i32_0 = arith.constant 0 : i32
    %c0_i32_1 = arith.constant 0 : i32
    return %arg0, %c0_i32, %c0_i32_0 : i32, i32, i32
  }
  func.func @transform_1(%arg0: i32) -> (i32, i32) {
    %c0_i32 = arith.constant 0 : i32
    %c0_i32_0 = arith.constant 0 : i32
    %c0_i32_1 = arith.constant 0 : i32
    return %c0_i32, %c0_i32_0 : i32, i32
  }
  func.func @transform_2(%arg0: i32) -> (i32, i32) {
    %c0_i32 = arith.constant 0 : i32
    %c0_i32_0 = arith.constant 0 : i32
    %c0_i32_1 = arith.constant 0 : i32
    return %c0_i32, %c0_i32_0 : i32, i32
  }
  func.func @transform_3(%arg0: i32) -> (i32, i32) {
    %c0_i32 = arith.constant 0 : i32
    %c0_i32_0 = arith.constant 0 : i32
    %c0_i32_1 = arith.constant 0 : i32
    return %c0_i32, %c0_i32_0 : i32, i32
  }
  func.func @transform_4(%arg0: i32) -> (i32, i32) {
    %c0_i32 = arith.constant 0 : i32
    %c0_i32_0 = arith.constant 0 : i32
    %c0_i32_1 = arith.constant 0 : i32
    return %c0_i32, %c0_i32_0 : i32, i32
  }
  func.func @transform_5(%arg0: i32) -> (i32, i32) {
    %c0_i32 = arith.constant 0 : i32
    %c0_i32_0 = arith.constant 0 : i32
    %c0_i32_1 = arith.constant 0 : i32
    return %c0_i32, %c0_i32_0 : i32, i32
  }
  func.func @transform_6(%arg0: i32) -> (i32, i32) {
    %c0_i32 = arith.constant 0 : i32
    %c0_i32_0 = arith.constant 0 : i32
    %c0_i32_1 = arith.constant 0 : i32
    return %c0_i32, %c0_i32_0 : i32, i32
  }
  func.func @transform_7(%arg0: i32) -> (i32, i32, i32) {
    %c0_i32 = arith.constant 0 : i32
    %c0_i32_0 = arith.constant 0 : i32
    %c0_i32_1 = arith.constant 0 : i32
    return %arg0, %c0_i32, %c0_i32_0 : i32, i32, i32
  }
}

</mosaic_0001>

<llo_original>
// kernel: tpu_custom_call.1
$region0: #{tpu_custom_call.1}
  #allocation0 [shape = 'u32[]', space=smem, size = 0x4, offset = 0x4, fixed_abs, tag = 'smem constant byte address 0x4 - core index']
  #allocation1 [shape = 'u32[144,128]{1,0:T(1,128)}', space=vmem, size = 0x12000, scoped, tag = 'internal scratch']
  %s0 = inlined_call_operand.hbm [shape: bf16[2,8,32], index: 0, kind: input, shape index: {}]
  %s1 = inlined_call_operand.hbm [shape: bf16[32,256], index: 1, kind: input, shape index: {}]
  %s2 = inlined_call_operand.vmem [shape: f32[1,256], index: 2, kind: input, shape index: {}]
  %s3 = inlined_call_operand.vmem [shape: bf16[1,128], index: 3, kind: input, shape index: {}]
  %s4 = inlined_call_operand.hbm [shape: bf16[128,128], index: 4, kind: input, shape index: {}]
  %s5 = inlined_call_operand.hbm [shape: bf16[128,128], index: 5, kind: input, shape index: {}]
  %s6 = inlined_call_operand.vmem [shape: f32[1,128], index: 6, kind: input, shape index: {}]
  %s7 = inlined_call_operand.hbm [shape: f32[2,8,128], index: 7, kind: output, shape index: {}]
  %s8 = sld [smem:[#allocation0]]
  $region54: #{tpu_custom_call.1} parent=0
    _
  %s10 = ssub.s32 1, %s8
  %s11 = scalar_select 0, %s10, %s8
  $region1: #{tpu_custom_call.1} parent=0
    #allocation2 [shape = 'u8[4096]{0}', space=vmem, size = 0x1000, scoped, tag = 'input window, operand 0, single buffered']
    #allocation3 [shape = 's32[1]{0}', space=sflag, size = 0x4, scoped, tag = 'scoped memory for tpu_custom_call.1']
    #allocation4 [shape = 's32[1]{0}', space=sflag, size = 0x4, scoped, tag = 'scoped memory for tpu_custom_call.1']
    #allocation5 [shape = 'u8[16384]{0}', space=vmem, size = 0x4000, scoped, tag = 'input window, operand 1, single buffered']
    #allocation6 [shape = 's32[1]{0}', space=sflag, size = 0x4, scoped, tag = 'scoped memory for tpu_custom_call.1']
    #allocation7 [shape = 'u8[32768]{0}', space=vmem, size = 0x8000, scoped, tag = 'input window, operand 4, single buffered']
    #allocation8 [shape = 'u8[32768]{0}', space=vmem, size = 0x8000, scoped, tag = 'input window, operand 5, single buffered']
    #allocation9 [shape = 's32[1]{0}', space=sflag, size = 0x4, scoped, tag = 'scoped memory for tpu_custom_call.1']
    #allocation10 [shape = 'u8[8192]{0}', space=vmem, size = 0x2000, scoped, tag = 'output window, operand 0, single buffered']
    %12 = vsyncpa [#allocation3], 0
    %13 = vsyncpa [#allocation6], 0
    %14 = vsyncpa [#allocation9], 0
    %15 = vsyncpa [#allocation4], 0
    // Predicated region
    $region2: #{tpu_custom_call.1} parent=1 // pred_check
      _
    $region3: #{tpu_custom_call.1} parent=1 // pred_check_branch
      %17 = sbr.rel (0) target = $region5
    $region4: #{tpu_custom_call.1} parent=1 // pred_region
      %s19 = ssub.s32 128, 128
      %20 = vsyncadd [#allocation3], %s19
      %s21 = sshll.u32 [#allocation2], 4
      %s22 = int_to_ptr.vmem [resolvable:$true] %s21
      %27 = dma.hbm_to_vmem [thread:$0]  %s0, 128, %s22, [#allocation3], 64, 64, 4
    $region5: #{tpu_custom_call.1} parent=1 // pred_fallthru
      _
    // Predicated region
    $region6: #{tpu_custom_call.1} parent=1 // pred_check
      _
    $region7: #{tpu_custom_call.1} parent=1 // pred_check_branch
      %29 = sbr.rel (0) target = $region9
    $region8: #{tpu_custom_call.1} parent=1 // pred_region
      %s31 = ssub.s32 512, 512
      %32 = vsyncadd [#allocation6], %s31
      %s33 = sshll.u32 [#allocation5], 4
      %s34 = int_to_ptr.vmem [resolvable:$true] %s33
      %39 = dma.hbm_to_vmem [thread:$0]  %s1, 512, %s34, [#allocation6], 128, 128, 8
    $region9: #{tpu_custom_call.1} parent=1 // pred_fallthru
      _
    // Predicated region
    $region10: #{tpu_custom_call.1} parent=1 // pred_check
      _
    $region11: #{tpu_custom_call.1} parent=1 // pred_check_branch
      %41 = sbr.rel (0) target = $region13
    $region12: #{tpu_custom_call.1} parent=1 // pred_region
      _
    $region13: #{tpu_custom_call.1} parent=1 // pred_fallthru
      _
    // Predicated region
    $region14: #{tpu_custom_call.1} parent=1 // pred_check
      _
    $region15: #{tpu_custom_call.1} parent=1 // pred_check_branch
      %43 = sbr.rel (0) target = $region17
    $region16: #{tpu_custom_call.1} parent=1 // pred_region
      _
    $region17: #{tpu_custom_call.1} parent=1 // pred_fallthru
      _
    // Predicated region
    $region18: #{tpu_custom_call.1} parent=1 // pred_check
      _
    $region19: #{tpu_custom_call.1} parent=1 // pred_check_branch
      %45 = sbr.rel (0) target = $region21
    $region20: #{tpu_custom_call.1} parent=1 // pred_region
      %s47 = ssub.s32 1024, 1024
      %48 = vsyncadd [#allocation6], %s47
      %s49 = sshll.u32 [#allocation7], 4
      %s50 = int_to_ptr.vmem [resolvable:$true] %s49
      %55 = dma.hbm_to_vmem [thread:$0]  %s4, 1024, %s50, [#allocation6], 64, 64, 4
    $region21: #{tpu_custom_call.1} parent=1 // pred_fallthru
      _
    // Predicated region
    $region22: #{tpu_custom_call.1} parent=1 // pred_check
      _
    $region23: #{tpu_custom_call.1} parent=1 // pred_check_branch
      %57 = sbr.rel (0) target = $region25
    $region24: #{tpu_custom_call.1} parent=1 // pred_region
      %s59 = ssub.s32 1024, 1024
      %60 = vsyncadd [#allocation9], %s59
      %s61 = sshll.u32 [#allocation8], 4
      %s62 = int_to_ptr.vmem [resolvable:$true] %s61
      %67 = dma.hbm_to_vmem [thread:$0]  %s5, 1024, %s62, [#allocation9], 64, 64, 4
    $region25: #{tpu_custom_call.1} parent=1 // pred_fallthru
      _
    // Predicated region
    $region26: #{tpu_custom_call.1} parent=1 // pred_check
      _
    $region27: #{tpu_custom_call.1} parent=1 // pred_check_branch
      %69 = sbr.rel (0) target = $region29
    $region28: #{tpu_custom_call.1} parent=1 // pred_region
      _
    $region29: #{tpu_custom_call.1} parent=1 // pred_fallthru
      _
    // Predicated region
    $region30: #{tpu_custom_call.1} parent=1 // pred_check
      _
    $region31: #{tpu_custom_call.1} parent=1 // pred_check_branch
      %71 = sbr.rel (0) target = $region33
    $region32: #{tpu_custom_call.1} parent=1 // pred_region
      %72 = dma.done [#allocation3], 128
    $region33: #{tpu_custom_call.1} parent=1 // pred_fallthru
      _
    // Predicated region
    $region34: #{tpu_custom_call.1} parent=1 // pred_check
      _
    $region35: #{tpu_custom_call.1} parent=1 // pred_check_branch
      %74 = sbr.rel (0) target = $region37
    $region36: #{tpu_custom_call.1} parent=1 // pred_region
      %75 = dma.done [#allocation6], 512
    $region37: #{tpu_custom_call.1} parent=1 // pred_fallthru
      _
    // Predicated region
    $region38: #{tpu_custom_call.1} parent=1 // pred_check
      _
    $region39: #{tpu_custom_call.1} parent=1 // pred_check_branch
      %77 = sbr.rel (0) target = $region41
    $region40: #{tpu_custom_call.1} parent=1 // pred_region
      %78 = dma.done [#allocation6], 1024
    $region41: #{tpu_custom_call.1} parent=1 // pred_fallthru
      _
    // Predicated region
    $region42: #{tpu_custom_call.1} parent=1 // pred_check
      _
    $region43: #{tpu_custom_call.1} parent=1 // pred_check_branch
      %80 = sbr.rel (0) target = $region45
    $region44: #{tpu_custom_call.1} parent=1 // pred_region
      %81 = dma.done [#allocation9], 1024
    $region45: #{tpu_custom_call.1} parent=1 // pred_fallthru
      _
    %v83 = vld [vmem:[#allocation2] sm:$0xf]
    %v84 = vld [vmem:[#allocation2 + $0x4] sm:$0xf]
    %v85 = vld [vmem:[#allocation5] sm:$0xff]
    %v86 = vld [vmem:[#allocation5 + $0x8] sm:$0xff]
    %v87 = vld [vmem:[#allocation5 + $0x10] sm:$0xff]
    %v88 = vld [vmem:[#allocation5 + $0x18] sm:$0xff]
    %v89 = vld [vmem:[%s2] sm:$0x3]
    %v91 = vlaneseq
    %v92 = vshrl.u32 %v91, 7
    %v93 = vsub.s32 0, %v92
    %v94 = vrot.slane %v89, %v93
    %v95 = vlaneseq
    %v96 = vshrl.u32 %v95, 7
    %v97 = vsub.s32 1, %v96
    %v98 = vrot.slane %v89, %v97
    %v103 = vunpack.c.l.b16 %v83
    %v104 = vunpack.c.l.b16 %v84
    %v105 = vpack.c.b16 %v104, %v103
    %v110 = vunpack.c.l.b16 %v85
    %v111 = vunpack.c.h.b16 %v85
    %v112 = vunpack.c.l.b16 %v86
    %v113 = vunpack.c.h.b16 %v86
    %v114 = vunpack.c.l.b16 %v87
    %v115 = vunpack.c.h.b16 %v87
    %v116 = vunpack.c.l.b16 %v88
    %v117 = vunpack.c.h.b16 %v88
    %v118 = vpack.c.b16 %v112, %v110
    %v119 = vpack.c.b16 %v113, %v111
    %v120 = vpack.c.b16 %v116, %v114
    %v121 = vpack.c.b16 %v117, %v115
    %vm126 = vcmask 261120
    %v128 = vsel %vm126, %v105, 0
    %130 = vmatprep.subr.bf16.mxu0 %v119
    %131 = vmatpush1.bf16.msra.mxu0 %v118
    %132 = vmatprep.subr.bf16.mxu0 %v121
    %133 = vmatpush1.bf16.msra.mxu0 %v120
    %134 = vmatprep.subr.bf16.mxu0 0
    %135 = vmatpush1.bf16.msra.mxu0 0
    %136 = vmatprep.subr.bf16.mxu0 0
    %137 = vmatpush1.bf16.msra.mxu0 0
    %138 = vmatprep.subr.bf16.mxu0 0
    %139 = vmatpush1.bf16.msra.mxu0 0
    %140 = vmatprep.subr.bf16.mxu0 0
    %141 = vmatpush1.bf16.msra.mxu0 0
    %142 = vmatprep.subr.bf16.mxu0 0
    %143 = vmatpush1.bf16.msra.mxu0 0
    %144 = vmatprep.subr.bf16.mxu0 0
    %145 = vmatpush1.bf16.msra.mxu0 0
    %146 = vmatprep.subr.bf16.mxu0 0
    %147 = vmatpush1.bf16.msra.mxu0 0
    %148 = vmatprep.subr.bf16.mxu0 0
    %149 = vmatpush1.bf16.msra.mxu0 0
    %150 = vmatprep.subr.bf16.mxu0 0
    %151 = vmatpush1.bf16.msra.mxu0 0
    %152 = vmatprep.subr.bf16.mxu0 0
    %153 = vmatpush1.bf16.msra.mxu0 0
    %154 = vmatprep.subr.bf16.mxu0 0
    %155 = vmatpush1.bf16.msra.mxu0 0
    %156 = vmatprep.subr.bf16.mxu0 0
    %157 = vmatpush1.bf16.msra.mxu0 0
    %158 = vmatprep.subr.bf16.mxu0 0
    %159 = vmatpush1.bf16.msra.mxu0 0
    %160 = vmatprep.subr.bf16.mxu0 0
    %161 = vmatpush1.bf16.msra.mxu0 0
    %162 = vmatprep.mubr.bf16.mxu0 0
    %163 = vmatmul.mubr.bf16.gmra.mrb[0].mxu0 %v128
    %v164 = vpop.f32.mrb[0].mxu0
    %v165 = vadd.f32 %v94, %v164
    %v166 = vpop.f32.mrb[0].mxu0
    %v167 = vadd.f32 %v98, %v166
    %v168 = vpop.f32.mrb[0].mxu0
    %v169 = vadd.f32 %v94, %v168
    %v170 = vpop.f32.mrb[0].mxu0
    %v171 = vadd.f32 %v98, %v170
    %172 = vdwg.mxu0
    %v173 = vmul.f32 %v165, %v165
    %v174 = vmul.f32 %v169, %v169
    %175 = vadd.xlane.f32.xlu0 %v173
    %v176 = vpop.xlane.xlu0 %175
    %177 = vadd.xlane.f32.xlu0 %v174
    %v178 = vpop.xlane.xlu0 %177
    %v179 = vmax.f32 %v176, 1e-24
    %v180 = vmax.f32 %v178, 1e-24
    %v181 = vrsqrt.pop %v179
    %v182 = vrsqrt.pop %v180
    %v183 = vmul.f32 %v165, %v181
    %v184 = vmul.f32 %v169, %v182
    %v185 = vmul.f32 %v167, %v167
    %v186 = vmul.f32 %v171, %v171
    %187 = vadd.xlane.f32.xlu0 %v185
    %v188 = vpop.xlane.xlu0 %187
    %189 = vadd.xlane.f32.xlu0 %v186
    %v190 = vpop.xlane.xlu0 %189
    %v191 = vmax.f32 %v188, 1e-24
    %v192 = vmax.f32 %v190, 1e-24
    %v193 = vrsqrt.pop %v191
    %v194 = vrsqrt.pop %v192
    %v195 = vmul.f32 %v167, %v193
    %v196 = vmul.f32 %v171, %v194
    %v197 = vpack.c.bf16 %v184, %v183
    %v199 = vunpack.c.l.b16 %v197
    %v200 = vunpack.c.h.b16 %v197
    %v201 = vpack.c.b16 %v199, %v199
    %v202 = vpack.c.b16 %v200, %v200
    %v205 = vld [vmem:[%s3] sm:$0x1]
    %206 = vmatprep.subr.bf16.mxu0 0
    %207 = vmatpush1.bf16.xpose.msra.mxu0 %v201
    %208 = vmatprep.subr.bf16.mxu0 0
    %209 = vmatpush1.bf16.xpose.msra.mxu0 0
    %210 = vmatprep.subr.bf16.mxu0 0
    %211 = vmatpush1.bf16.xpose.msra.mxu0 0
    %212 = vmatprep.subr.bf16.mxu0 0
    %213 = vmatpush1.bf16.xpose.msra.mxu0 0
    %214 = vmatprep.subr.bf16.mxu0 0
    %215 = vmatpush1.bf16.xpose.msra.mxu0 0
    %216 = vmatprep.subr.bf16.mxu0 0
    %217 = vmatpush1.bf16.xpose.msra.mxu0 0
    %218 = vmatprep.subr.bf16.mxu0 0
    %219 = vmatpush1.bf16.xpose.msra.mxu0 0
    %220 = vmatprep.subr.bf16.mxu0 0
    %221 = vmatpush1.bf16.xpose.msra.mxu0 0
    %222 = vmatprep.subr.bf16.mxu0 0
    %223 = vmatpush1.bf16.xpose.msra.mxu0 0
    %224 = vmatprep.subr.bf16.mxu0 0
    %225 = vmatpush1.bf16.xpose.msra.mxu0 0
    %226 = vmatprep.subr.bf16.mxu0 0
    %227 = vmatpush1.bf16.xpose.msra.mxu0 0
    %228 = vmatprep.subr.bf16.mxu0 0
    %229 = vmatpush1.bf16.xpose.msra.mxu0 0
    %230 = vmatprep.subr.bf16.mxu0 0
    %231 = vmatpush1.bf16.xpose.msra.mxu0 0
    %232 = vmatprep.subr.bf16.mxu0 0
    %233 = vmatpush1.bf16.xpose.msra.mxu0 0
    %234 = vmatprep.subr.bf16.mxu0 0
    %235 = vmatpush1.bf16.xpose.msra.mxu0 0
    %236 = vmatprep.subr.bf16.mxu0 0
    %237 = vmatpush1.bf16.xpose.msra.mxu0 0
    %238 = vmatprep.mubr.bf16.mxu0 0
    %239 = vmatmul.mubr.bf16.gmra.mrb[0].mxu0 %v205
    %v240 = vpop.f32.mrb[0].mxu0
    %v241 = vadd.f32 0.0, %v240
    %v242 = vpop.f32.mrb[0].mxu0
    %v243 = vpop.f32.mrb[0].mxu0
    %v244 = vpop.f32.mrb[0].mxu0
    %245 = vdwg.mxu0
    %246 = vmatprep.subr.bf16.mxu0 0
    %247 = vmatpush1.bf16.xpose.msra.mxu0 %v202
    %248 = vmatprep.subr.bf16.mxu0 0
    %249 = vmatpush1.bf16.xpose.msra.mxu0 0
    %250 = vmatprep.subr.bf16.mxu0 0
    %251 = vmatpush1.bf16.xpose.msra.mxu0 0
    %252 = vmatprep.subr.bf16.mxu0 0
    %253 = vmatpush1.bf16.xpose.msra.mxu0 0
    %254 = vmatprep.subr.bf16.mxu0 0
    %255 = vmatpush1.bf16.xpose.msra.mxu0 0
    %256 = vmatprep.subr.bf16.mxu0 0
    %257 = vmatpush1.bf16.xpose.msra.mxu0 0
    %258 = vmatprep.subr.bf16.mxu0 0
    %259 = vmatpush1.bf16.xpose.msra.mxu0 0
    %260 = vmatprep.subr.bf16.mxu0 0
    %261 = vmatpush1.bf16.xpose.msra.mxu0 0
    %262 = vmatprep.subr.bf16.mxu0 0
    %263 = vmatpush1.bf16.xpose.msra.mxu0 0
    %264 = vmatprep.subr.bf16.mxu0 0
    %265 = vmatpush1.bf16.xpose.msra.mxu0 0
    %266 = vmatprep.subr.bf16.mxu0 0
    %267 = vmatpush1.bf16.xpose.msra.mxu0 0
    %268 = vmatprep.subr.bf16.mxu0 0
    %269 = vmatpush1.bf16.xpose.msra.mxu0 0
    %270 = vmatprep.subr.bf16.mxu0 0
    %271 = vmatpush1.bf16.xpose.msra.mxu0 0
    %272 = vmatprep.subr.bf16.mxu0 0
    %273 = vmatpush1.bf16.xpose.msra.mxu0 0
    %274 = vmatprep.subr.bf16.mxu0 0
    %275 = vmatpush1.bf16.xpose.msra.mxu0 0
    %276 = vmatprep.subr.bf16.mxu0 0
    %277 = vmatpush1.bf16.xpose.msra.mxu0 0
    %278 = vmatprep.mubr.bf16.mxu0 0
    %279 = vmatmul.mubr.bf16.gmra.mrb[0].mxu0 %v205
    %v280 = vpop.f32.mrb[0].mxu0
    %v281 = vadd.f32 0.0, %v280
    %v282 = vpop.f32.mrb[0].mxu0
    %v283 = vpop.f32.mrb[0].mxu0
    %v284 = vpop.f32.mrb[0].mxu0
    %285 = vdwg.mxu0
    %v286 = vmul.f32 %v241, 0.25
    %v287 = vmul.f32 %v281, 0.25
    %v288 = vmul.f32 %v286, %v286
    %v289 = vmul.f32 %v287, %v287
    %vm290 = vcmask 57344
    %v291 = vsel %vm290, %v288, 0.0
    %292 = vadd.xlane.f32.xlu0 %v291
    %v293 = vpop.xlane.xlu0 %292
    %v294 = vsel %vm290, %v289, 0.0
    %295 = vadd.xlane.f32.xlu0 %v294
    %v296 = vpop.xlane.xlu0 %295
    %v297 = vmax.f32 %v293, 1e-24
    %v298 = vmax.f32 %v296, 1e-24
    %v299 = vrsqrt.pop %v297
    %v300 = vrsqrt.pop %v298
    %v301 = vmul.f32 %v286, %v299
    %v302 = vmul.f32 %v287, %v300
    %v303 = vpack.c.bf16 %v301, %v301
    %v304 = vpack.c.bf16 %v302, %v302
    %vm305 = vcmask 64512
    %v307 = vsel %vm305, %v303, 0
    %vm309 = vcmask 1043456
    %v311 = vsel %vm309, %v201, 0
    %313 = vmatprep.subr.bf16.mxu0 0
    %314 = vmatpush1.bf16.msra.mxu0 %v311
    %315 = vmatprep.subr.bf16.mxu0 0
    %316 = vmatpush1.bf16.msra.mxu0 0
    %317 = vmatprep.subr.bf16.mxu0 0
    %318 = vmatpush1.bf16.msra.mxu0 0
    %319 = vmatprep.subr.bf16.mxu0 0
    %320 = vmatpush1.bf16.msra.mxu0 0
    %321 = vmatprep.subr.bf16.mxu0 0
    %322 = vmatpush1.bf16.msra.mxu0 0
    %323 = vmatprep.subr.bf16.mxu0 0
    %324 = vmatpush1.bf16.msra.mxu0 0
    %325 = vmatprep.subr.bf16.mxu0 0
    %326 = vmatpush1.bf16.msra.mxu0 0
    %327 = vmatprep.subr.bf16.mxu0 0
    %328 = vmatpush1.bf16.msra.mxu0 0
    %329 = vmatprep.subr.bf16.mxu0 0
    %330 = vmatpush1.bf16.msra.mxu0 0
    %331 = vmatprep.subr.bf16.mxu0 0
    %332 = vmatpush1.bf16.msra.mxu0 0
    %333 = vmatprep.subr.bf16.mxu0 0
    %334 = vmatpush1.bf16.msra.mxu0 0
    %335 = vmatprep.subr.bf16.mxu0 0
    %336 = vmatpush1.bf16.msra.mxu0 0
    %337 = vmatprep.subr.bf16.mxu0 0
    %338 = vmatpush1.bf16.msra.mxu0 0
    %339 = vmatprep.subr.bf16.mxu0 0
    %340 = vmatpush1.bf16.msra.mxu0 0
    %341 = vmatprep.subr.bf16.mxu0 0
    %342 = vmatpush1.bf16.msra.mxu0 0
    %343 = vmatprep.subr.bf16.mxu0 0
    %344 = vmatpush1.bf16.msra.mxu0 0
    %345 = vmatprep.mubr.bf16.mxu0 0
    %346 = vmatmul.mubr.bf16.gmra.mrb[0].mxu0 %v307
    %v347 = vpop.f32.mrb[0].mxu0
    %v348 = vadd.f32 0.0, %v347
    %v349 = vpop.f32.mrb[0].mxu0
    %v350 = vpop.f32.mrb[0].mxu0
    %v351 = vpop.f32.mrb[0].mxu0
    %352 = vdwg.mxu0
    %v354 = vsel %vm305, %v304, 0
    %v357 = vsel %vm309, %v202, 0
    %359 = vmatprep.subr.bf16.mxu0 0
    %360 = vmatpush1.bf16.msra.mxu0 %v357
    %361 = vmatprep.subr.bf16.mxu0 0
    %362 = vmatpush1.bf16.msra.mxu0 0
    %363 = vmatprep.subr.bf16.mxu0 0
    %364 = vmatpush1.bf16.msra.mxu0 0
    %365 = vmatprep.subr.bf16.mxu0 0
    %366 = vmatpush1.bf16.msra.mxu0 0
    %367 = vmatprep.subr.bf16.mxu0 0
    %368 = vmatpush1.bf16.msra.mxu0 0
    %369 = vmatprep.subr.bf16.mxu0 0
    %370 = vmatpush1.bf16.msra.mxu0 0
    %371 = vmatprep.subr.bf16.mxu0 0
    %372 = vmatpush1.bf16.msra.mxu0 0
    %373 = vmatprep.subr.bf16.mxu0 0
    %374 = vmatpush1.bf16.msra.mxu0 0
    %375 = vmatprep.subr.bf16.mxu0 0
    %376 = vmatpush1.bf16.msra.mxu0 0
    %377 = vmatprep.subr.bf16.mxu0 0
    %378 = vmatpush1.bf16.msra.mxu0 0
    %379 = vmatprep.subr.bf16.mxu0 0
    %380 = vmatpush1.bf16.msra.mxu0 0
    %381 = vmatprep.subr.bf16.mxu0 0
    %382 = vmatpush1.bf16.msra.mxu0 0
    %383 = vmatprep.subr.bf16.mxu0 0
    %384 = vmatpush1.bf16.msra.mxu0 0
    %385 = vmatprep.subr.bf16.mxu0 0
    %386 = vmatpush1.bf16.msra.mxu0 0
    %387 = vmatprep.subr.bf16.mxu0 0
    %388 = vmatpush1.bf16.msra.mxu0 0
    %389 = vmatprep.subr.bf16.mxu0 0
    %390 = vmatpush1.bf16.msra.mxu0 0
    %391 = vmatprep.mubr.bf16.mxu0 0
    %392 = vmatmul.mubr.bf16.gmra.mrb[0].mxu0 %v354
    %v393 = vpop.f32.mrb[0].mxu0
    %v394 = vadd.f32 0.0, %v393
    %v395 = vpop.f32.mrb[0].mxu0
    %v396 = vpop.f32.mrb[0].mxu0
    %v397 = vpop.f32.mrb[0].mxu0
    %398 = vdwg.mxu0
    %v399 = vlaneseq
    %v400 = vshrl.u32 %v399, 7
    %v401 = vsub.s32 0, %v400
    %v402 = vrot.slane %v348, %v401
    %v403 = vlaneseq
    %v404 = vshrl.u32 %v403, 7
    %v405 = vsub.s32 0, %v404
    %v406 = vrot.slane %v394, %v405
    %v407 = vmul.f32 %v402, %v195
    %v408 = vmul.f32 %v406, %v196
    %v409 = vpack.c.bf16 %v408, %v407
    %v410 = vld [vmem:[#allocation7] sm:$0xf]
    %v411 = vld [vmem:[#allocation7 + $0x4] sm:$0xf]
    %v412 = vld [vmem:[#allocation7 + $0x8] sm:$0xf]
    %v413 = vld [vmem:[#allocation7 + $0xc] sm:$0xf]
    %v414 = vld [vmem:[#allocation7 + $0x10] sm:$0xf]
    %v415 = vld [vmem:[#allocation7 + $0x14] sm:$0xf]
    %v416 = vld [vmem:[#allocation7 + $0x18] sm:$0xf]
    %v417 = vld [vmem:[#allocation7 + $0x1c] sm:$0xf]
    %v418 = vld [vmem:[#allocation7 + $0x20] sm:$0xf]
    %v419 = vld [vmem:[#allocation7 + $0x24] sm:$0xf]
    %v420 = vld [vmem:[#allocation7 + $0x28] sm:$0xf]
    %v421 = vld [vmem:[#allocation7 + $0x2c] sm:$0xf]
    %v422 = vld [vmem:[#allocation7 + $0x30] sm:$0xf]
    %v423 = vld [vmem:[#allocation7 + $0x34] sm:$0xf]
    %v424 = vld [vmem:[#allocation7 + $0x38] sm:$0xf]
    %v425 = vld [vmem:[#allocation7 + $0x3c] sm:$0xf]
    %v426 = vld [vmem:[#allocation8] sm:$0xf]
    %v427 = vld [vmem:[#allocation8 + $0x4] sm:$0xf]
    %v428 = vld [vmem:[#allocation8 + $0x8] sm:$0xf]
    %v429 = vld [vmem:[#allocation8 + $0xc] sm:$0xf]
    %v430 = vld [vmem:[#allocation8 + $0x10] sm:$0xf]
    %v431 = vld [vmem:[#allocation8 + $0x14] sm:$0xf]
    %v432 = vld [vmem:[#allocation8 + $0x18] sm:$0xf]
    %v433 = vld [vmem:[#allocation8 + $0x1c] sm:$0xf]
    %v434 = vld [vmem:[#allocation8 + $0x20] sm:$0xf]
    %v435 = vld [vmem:[#allocation8 + $0x24] sm:$0xf]
    %v436 = vld [vmem:[#allocation8 + $0x28] sm:$0xf]
    %v437 = vld [vmem:[#allocation8 + $0x2c] sm:$0xf]
    %v438 = vld [vmem:[#allocation8 + $0x30] sm:$0xf]
    %v439 = vld [vmem:[#allocation8 + $0x34] sm:$0xf]
    %v440 = vld [vmem:[#allocation8 + $0x38] sm:$0xf]
    %v441 = vld [vmem:[#allocation8 + $0x3c] sm:$0xf]
    %v458 = vunpack.c.l.b16 %v426
    %v459 = vunpack.c.l.b16 %v427
    %v460 = vunpack.c.l.b16 %v428
    %v461 = vunpack.c.l.b16 %v429
    %v462 = vunpack.c.l.b16 %v430
    %v463 = vunpack.c.l.b16 %v431
    %v464 = vunpack.c.l.b16 %v432
    %v465 = vunpack.c.l.b16 %v433
    %v466 = vunpack.c.l.b16 %v434
    %v467 = vunpack.c.l.b16 %v435
    %v468 = vunpack.c.l.b16 %v436
    %v469 = vunpack.c.l.b16 %v437
    %v470 = vunpack.c.l.b16 %v438
    %v471 = vunpack.c.l.b16 %v439
    %v472 = vunpack.c.l.b16 %v440
    %v473 = vunpack.c.l.b16 %v441
    %v474 = vpack.c.b16 %v459, %v458
    %v475 = vpack.c.b16 %v461, %v460
    %v476 = vpack.c.b16 %v463, %v462
    %v477 = vpack.c.b16 %v465, %v464
    %v478 = vpack.c.b16 %v467, %v466
    %v479 = vpack.c.b16 %v469, %v468
    %v480 = vpack.c.b16 %v471, %v470
    %v481 = vpack.c.b16 %v473, %v472
    %490 = vmatprep.subr.bf16.mxu0 0
    %491 = vmatpush1.bf16.msra.mxu0 %v474
    %492 = vmatprep.subr.bf16.mxu0 0
    %493 = vmatpush1.bf16.msra.mxu0 %v475
    %494 = vmatprep.subr.bf16.mxu0 0
    %495 = vmatpush1.bf16.msra.mxu0 %v476
    %496 = vmatprep.subr.bf16.mxu0 0
    %497 = vmatpush1.bf16.msra.mxu0 %v477
    %498 = vmatprep.subr.bf16.mxu0 0
    %499 = vmatpush1.bf16.msra.mxu0 %v478
    %500 = vmatprep.subr.bf16.mxu0 0
    %501 = vmatpush1.bf16.msra.mxu0 %v479
    %502 = vmatprep.subr.bf16.mxu0 0
    %503 = vmatpush1.bf16.msra.mxu0 %v480
    %504 = vmatprep.subr.bf16.mxu0 0
    %505 = vmatpush1.bf16.msra.mxu0 %v481
    %506 = vmatprep.subr.bf16.mxu0 0
    %507 = vmatpush1.bf16.msra.mxu0 0
    %508 = vmatprep.subr.bf16.mxu0 0
    %509 = vmatpush1.bf16.msra.mxu0 0
    %510 = vmatprep.subr.bf16.mxu0 0
    %511 = vmatpush1.bf16.msra.mxu0 0
    %512 = vmatprep.subr.bf16.mxu0 0
    %513 = vmatpush1.bf16.msra.mxu0 0
    %514 = vmatprep.subr.bf16.mxu0 0
    %515 = vmatpush1.bf16.msra.mxu0 0
    %516 = vmatprep.subr.bf16.mxu0 0
    %517 = vmatpush1.bf16.msra.mxu0 0
    %518 = vmatprep.subr.bf16.mxu0 0
    %519 = vmatpush1.bf16.msra.mxu0 0
    %520 = vmatprep.subr.bf16.mxu0 0
    %521 = vmatpush1.bf16.msra.mxu0 0
    %522 = vmatprep.mubr.bf16.mxu0 0
    %523 = vmatmul.mubr.bf16.gmra.mrb[0].mxu0 %v197
    %v524 = vpop.f32.mrb[0].mxu0
    %v525 = vadd.f32 0.0, %v524
    %v526 = vpop.f32.mrb[0].mxu0
    %v527 = vpop.f32.mrb[0].mxu0
    %v528 = vadd.f32 0.0, %v527
    %v529 = vpop.f32.mrb[0].mxu0
    %530 = vdwg.mxu0
    %v547 = vunpack.c.l.b16 %v410
    %v548 = vunpack.c.l.b16 %v411
    %v549 = vunpack.c.l.b16 %v412
    %v550 = vunpack.c.l.b16 %v413
    %v551 = vunpack.c.l.b16 %v414
    %v552 = vunpack.c.l.b16 %v415
    %v553 = vunpack.c.l.b16 %v416
    %v554 = vunpack.c.l.b16 %v417
    %v555 = vunpack.c.l.b16 %v418
    %v556 = vunpack.c.l.b16 %v419
    %v557 = vunpack.c.l.b16 %v420
    %v558 = vunpack.c.l.b16 %v421
    %v559 = vunpack.c.l.b16 %v422
    %v560 = vunpack.c.l.b16 %v423
    %v561 = vunpack.c.l.b16 %v424
    %v562 = vunpack.c.l.b16 %v425
    %v563 = vpack.c.b16 %v548, %v547
    %v564 = vpack.c.b16 %v550, %v549
    %v565 = vpack.c.b16 %v552, %v551
    %v566 = vpack.c.b16 %v554, %v553
    %v567 = vpack.c.b16 %v556, %v555
    %v568 = vpack.c.b16 %v558, %v557
    %v569 = vpack.c.b16 %v560, %v559
    %v570 = vpack.c.b16 %v562, %v561
    %579 = vmatprep.subr.bf16.mxu0 0
    %580 = vmatpush1.bf16.msra.mxu0 %v563
    %581 = vmatprep.subr.bf16.mxu0 0
    %582 = vmatpush1.bf16.msra.mxu0 %v564
    %583 = vmatprep.subr.bf16.mxu0 0
    %584 = vmatpush1.bf16.msra.mxu0 %v565
    %585 = vmatprep.subr.bf16.mxu0 0
    %586 = vmatpush1.bf16.msra.mxu0 %v566
    %587 = vmatprep.subr.bf16.mxu0 0
    %588 = vmatpush1.bf16.msra.mxu0 %v567
    %589 = vmatprep.subr.bf16.mxu0 0
    %590 = vmatpush1.bf16.msra.mxu0 %v568
    %591 = vmatprep.subr.bf16.mxu0 0
    %592 = vmatpush1.bf16.msra.mxu0 %v569
    %593 = vmatprep.subr.bf16.mxu0 0
    %594 = vmatpush1.bf16.msra.mxu0 %v570
    %595 = vmatprep.subr.bf16.mxu0 0
    %596 = vmatpush1.bf16.msra.mxu0 0
    %597 = vmatprep.subr.bf16.mxu0 0
    %598 = vmatpush1.bf16.msra.mxu0 0
    %599 = vmatprep.subr.bf16.mxu0 0
    %600 = vmatpush1.bf16.msra.mxu0 0
    %601 = vmatprep.subr.bf16.mxu0 0
    %602 = vmatpush1.bf16.msra.mxu0 0
    %603 = vmatprep.subr.bf16.mxu0 0
    %604 = vmatpush1.bf16.msra.mxu0 0
    %605 = vmatprep.subr.bf16.mxu0 0
    %606 = vmatpush1.bf16.msra.mxu0 0
    %607 = vmatprep.subr.bf16.mxu0 0
    %608 = vmatpush1.bf16.msra.mxu0 0
    %609 = vmatprep.subr.bf16.mxu0 0
    %610 = vmatpush1.bf16.msra.mxu0 0
    %611 = vmatprep.mubr.bf16.mxu0 0
    %612 = vmatmul.mubr.bf16.gmra.mrb[0].mxu0 %v409
    %v613 = vpop.f32.mrb[0].mxu0
    %v614 = vadd.f32 %v525, %v613
    %v615 = vpop.f32.mrb[0].mxu0
    %v616 = vpop.f32.mrb[0].mxu0
    %v617 = vadd.f32 %v528, %v616
    %v618 = vpop.f32.mrb[0].mxu0
    %619 = vdwg.mxu0
    %v620 = vld [vmem:[%s6] sm:$0x1]
    %v622 = vlaneseq
    %v623 = vshrl.u32 %v622, 7
    %v624 = vsub.s32 0, %v623
    %v625 = vrot.slane %v620, %v624
    %v627 = vadd.f32 %v614, %v625
    %v628 = vadd.f32 %v617, %v625
    %629 = vst [vmem:[#allocation10] sm:$0xff] %v627
    %630 = vst [vmem:[#allocation10 + $0x8] sm:$0xff] %v628
    // Predicated region
    $region46: #{tpu_custom_call.1} parent=1 // pred_check
      _
    $region47: #{tpu_custom_call.1} parent=1 // pred_check_branch
      %632 = sbr.rel (0) target = $region49
    $region48: #{tpu_custom_call.1} parent=1 // pred_region
      %s634 = ssub.s32 256, 256
      %635 = vsyncadd [#allocation4], %s634
      %s636 = sshll.u32 [#allocation10], 4
      %s637 = int_to_ptr.vmem [resolvable:$true] %s636
      %642 = dma.vmem_to_hbm [thread:$0]  %s637, 256, %s7, [#allocation4], 128, 128, 8
    $region49: #{tpu_custom_call.1} parent=1 // pred_fallthru
      _
    // Predicated region
    $region50: #{tpu_custom_call.1} parent=1 // pred_check
      _
    $region51: #{tpu_custom_call.1} parent=1 // pred_check_branch
      %644 = sbr.rel (0) target = $region53
    $region52: #{tpu_custom_call.1} parent=1 // pred_region
      %645 = dma.done [#allocation4], 256
    $region53: #{tpu_custom_call.1} parent=1 // pred_fallthru
      _
    %646 = vsyncpa [#allocation3], 1
    %647 = vsyncpa [#allocation6], 1
    %648 = vsyncpa [#allocation9], 1
    %649 = vsyncpa [#allocation4], 1

</llo_original>
